<compile_context>
chip_gen: v7x
topology: tpu7x:2x2x1
jax: 0.10.0
libtpu: 0.0.40
codegen_flags: <defaults>
</compile_context>

<pallas_src>
import functools

import jax
import jax.numpy as jnp
from jax import lax
from jax.experimental import pallas as pl
from jax.experimental.pallas import tpu as pltpu


# ---------------------------------------------------------------------------
# Fused kernel: one (image n, H-band b) step of  pw(1x1) -> dw(3x3, bias)
# ---------------------------------------------------------------------------
def _fused_bsconv_kernel(x_ref, halo_ref, wpw_ref, wdw_ref, bias_ref, o_ref, p_ref,
                         *, W, K, TH, B, use_mxu):
    """Refs (per grid step):
      x_ref:    (Cin, TH*W)       input band, flattened spatial on the lane axis
      halo_ref: (Cin, 2*W)        [row above band | row below band] (zeros at edges)
      wpw_ref:  (Cout, Cin)       pointwise weights
      wdw_ref:  (Cout, K*K)       depthwise weights, tap-major (ky*K + kx)
      bias_ref: (Cout, 1)         depthwise bias
      o_ref:    (Cout, TH*W)      output band (lane-dense store)
      p_ref:    (Cout, TH*W+2*B)  VMEM scratch holding the pointwise result:
                                  main band at lane offset B (128-aligned),
                                  top halo row at [B-W, B), bottom at [B+L, B+L+W).
    """
    f32 = jnp.float32
    pad = K // 2
    L = TH * W
    Cin = x_ref.shape[0]
    p_dtype = p_ref.dtype
    wpw = wpw_ref[...]

    def pointwise(xb):  # (Cin, L') -> (Cout, L') in f32
        if use_mxu:
            return jnp.dot(wpw, xb, preferred_element_type=f32)
        # tiny channel counts: Cin broadcast-FMAs on the VPU (MXU would be <1% used)
        acc = wpw[:, 0:1].astype(f32) * xb[0:1, :].astype(f32)
        for ci in range(1, Cin):
            acc = acc + wpw[:, ci:ci + 1].astype(f32) * xb[ci:ci + 1, :].astype(f32)
        return acc

    # ---- pointwise 1x1: main band (aligned, lane-dense store) + halo rows ----
    p_ref[:, B:B + L] = pointwise(x_ref[...]).astype(p_dtype)
    pw_halo = pointwise(halo_ref[...]).astype(p_dtype)            # (Cout, 2*W)
    p_ref[:, B - W:B] = pw_halo[:, :W]                            # row above the band
    p_ref[:, B + L:B + L + W] = pw_halo[:, W:]                    # row below the band

    # ---- depthwise KxK, stride 1, zero padding --------------------------------
    # Output flat index f = i*W + w reads p_ref at f + B + (ky-pad)*W + (kx-pad).
    # The kx = 0 / kx = K-1 groups would wrap across the left/right image border;
    # they are zeroed once per group with a boolean select.  The two stray
    # (never-written) scratch columns those groups can touch are always masked.
    col = lax.broadcasted_iota(jnp.int32, (1, L), 1) % W
    wdw = wdw_ref[...].astype(f32)
    wts = [wdw[:, t:t + 1] for t in range(K * K)]                 # hoisted (Cout,1)

    acc = bias_ref[...].astype(f32)                               # bias folded into init
    for kx in range(K):                                           # static unroll
        dx = kx - pad
        g = None
        for ky in range(K):
            off = B + (ky - pad) * W + dx                         # static lane offset
            term = p_ref[:, off:off + L].astype(f32) * wts[ky * K + kx]
            g = term if g is None else g + term
        if dx < 0:
            g = jnp.where(col >= -dx, g, 0.0)
        elif dx > 0:
            g = jnp.where(col < W - dx, g, 0.0)
        acc = acc + g
    o_ref[...] = acc.astype(o_ref.dtype)


# ---------------------------------------------------------------------------
# Tiling / glue helpers
# ---------------------------------------------------------------------------
def _band_bytes(th, W, Cin, Cout, in_itemsize, p_itemsize, pbase):
    io = 2 * (Cin + Cout) * th * W * in_itemsize        # double-buffered in/out bands
    io += 2 * 2 * Cin * W * in_itemsize                 # double-buffered halo rows
    scratch = Cout * (th * W + 2 * pbase) * p_itemsize  # pointwise scratch (single buf)
    temps = 3 * Cout * th * W * 4                       # f32 tap-group / acc temporaries
    return io + scratch + temps


def _choose_tile_h(H, W, N, Cin, Cout, in_itemsize, p_itemsize, pbase, band_budget):
    """Largest H-band TH (divisor of H) with (TH*W) % 128 == 0 (or TH == H) whose
    per-step VMEM footprint fits `band_budget`; prefers >= 2 total grid steps so
    both v7x TensorCores get work."""
    legal = [d for d in range(1, H + 1)
             if H % d == 0 and ((d * W) % 128 == 0 or d == H)]
    fitting = [d for d in legal
               if _band_bytes(d, W, Cin, Cout, in_itemsize, p_itemsize, pbase)
               <= band_budget]
    fitting = fitting or [min(legal)]
    th = max(fitting)
    if N * (H // th) < 2:                               # keep both v7x TCs busy
        multi = [d for d in fitting if H // d >= 2]
        if multi:
            th = max(multi)
    return th


def _build_halo_rows(x_nchw, TH):
    """Rows bordering each H-band as (N, NB, Cin, 2*W): [.., :W] = row just above
    the band, [.., W:] = row just below; zeros at the image top/bottom edges.
    Tiny strided gather done once in XLA (a few rows, not a full pad pass)."""
    N, Cin, H, W = x_nchw.shape
    NB = H // TH
    z = jnp.zeros((N, Cin, 1, W), x_nchw.dtype)
    if NB == 1:
        tops, bots = z, z
    else:
        tops = jnp.concatenate([z, x_nchw[:, :, TH - 1:H - 1:TH, :]], axis=2)
        bots = jnp.concatenate([x_nchw[:, :, TH::TH, :], z], axis=2)
    halo = jnp.concatenate([tops[:, :, :, None, :], bots[:, :, :, None, :]], axis=3)
    halo = halo.reshape(N, Cin, NB, 2 * W)
    return jnp.transpose(halo, (0, 2, 1, 3))            # (N, NB, Cin, 2*W)


def _vmem_capacity_bytes():
    try:
        cap = getattr(pltpu.get_tpu_info(), "vmem_capacity_bytes", None)
        if cap:
            return int(cap)
    except Exception:
        pass
    return 64 * 1024 * 1024                              # conservative (v7x) fallback


# ---------------------------------------------------------------------------
# BSConvU forward: pw (1x1, no bias) -> dw (3x3, groups=Cout, bias), fused
# ---------------------------------------------------------------------------
@functools.partial(jax.jit, static_argnames=("padding",))
def bsconv_u_forward(x_nchw, w_pw, w_dw, b_dw, padding=1):
    """x_nchw: (N,Cin,H,W); w_pw: (Cout,Cin,1,1); w_dw: (Cout,1,K,K); b_dw: (Cout,)."""
    N, Cin, H, W = x_nchw.shape
    Cout = w_pw.shape[0]
    K = w_dw.shape[-1]
    assert w_pw.shape == (Cout, Cin, 1, 1) and w_dw.shape == (Cout, 1, K, K)
    # TODO(synk): only the module defaults are implemented here
    # (kernel_size=3, stride=1, padding=1, dilation=1, padding_mode='zeros').
    assert K == 3 and padding == K // 2, "fused kernel supports 3x3, stride 1, padding 1"

    dtype = x_nchw.dtype
    in_itemsize = jnp.dtype(dtype).itemsize
    # bf16 inputs keep a bf16 pointwise intermediate (v6e/v7x VALUs run bf16
    # natively; halves scratch bytes).  f32 stays f32 (also right on v5e).
    p_dtype = jnp.bfloat16 if dtype == jnp.bfloat16 else jnp.float32
    p_itemsize = jnp.dtype(p_dtype).itemsize

    # aligned base offset of the main band in the pointwise scratch: multiple of
    # 128 and >= W+1 so the top-halo row (and its masked stray column) stay in bounds
    B = (W // 128 + 1) * 128

    # generation-aware sizing: band budget ~VMEM/4, vmem limit ~3/4 VMEM
    vmem_cap = _vmem_capacity_bytes()
    band_budget = vmem_cap // 4
    TH = _choose_tile_h(H, W, N, Cin, Cout, in_itemsize, p_itemsize, B, band_budget)
    NB = H // TH
    L = TH * W
    use_mxu = Cin > 8

    # ---- layout glue: free reshapes + a tiny halo gather (no full pad pass) --
    x_flat = x_nchw.reshape(N, Cin, H * W)               # spatial on the lane axis
    halo = _build_halo_rows(x_nchw, TH)                  # (N, NB, Cin, 2*W)
    wpw2 = w_pw.reshape(Cout, Cin)
    wdw2 = w_dw.reshape(Cout, K * K)
    bias2 = b_dw.reshape(Cout, 1)

    kernel = functools.partial(_fused_bsconv_kernel,
                               W=W, K=K, TH=TH, B=B, use_mxu=use_mxu)

    per_step_bytes = _band_bytes(TH, W, Cin, Cout, in_itemsize, p_itemsize, B)
    vmem_limit = int(min(vmem_cap * 3 // 4, max(32 * 1024 * 1024, 2 * per_step_bytes)))
    flops = 2 * N * H * W * Cout * (Cin + K * K)
    bytes_accessed = int(in_itemsize * (x_flat.size + halo.size + wpw2.size + wdw2.size
                                        + bias2.size + N * Cout * H * W))

    out_flat = pl.pallas_call(
        kernel,
        out_shape=jax.ShapeDtypeStruct((N, Cout, H * W), dtype),
        grid=(N, NB),
        in_specs=[
            pl.BlockSpec((None, Cin, L), lambda n, b: (n, 0, b)),           # x band
            pl.BlockSpec((None, None, Cin, 2 * W), lambda n, b: (n, b, 0, 0)),  # halo rows
            pl.BlockSpec((Cout, Cin), lambda n, b: (0, 0)),                 # pw weights
            pl.BlockSpec((Cout, K * K), lambda n, b: (0, 0)),               # dw weights
            pl.BlockSpec((Cout, 1), lambda n, b: (0, 0)),                   # dw bias
        ],
        out_specs=pl.BlockSpec((None, Cout, L), lambda n, b: (n, 0, b)),
        scratch_shapes=[pltpu.VMEM((Cout, L + 2 * B), p_dtype)],            # pw scratch
        compiler_params=pltpu.CompilerParams(
            dimension_semantics=("parallel", "parallel"),
            vmem_limit_bytes=vmem_limit),
        cost_estimate=pl.CostEstimate(
            flops=flops, transcendentals=0, bytes_accessed=bytes_accessed),
    )(x_flat, halo, wpw2, wdw2, bias2)

    return out_flat.reshape(N, Cout, H, W)


# ---------------------------------------------------------------------------
# Reference (pure XLA) for verification
# ---------------------------------------------------------------------------
def bsconv_u_reference(x_nchw, w_pw, w_dw, b_dw, padding=1):
    y = lax.conv_general_dilated(
        x_nchw, w_pw, window_strides=(1, 1), padding="VALID",
        dimension_numbers=("NCHW", "OIHW", "NCHW"))
    Cout = w_dw.shape[0]
    z = lax.conv_general_dilated(
        y, w_dw, window_strides=(1, 1),
        padding=((padding, padding), (padding, padding)),
        dimension_numbers=("NCHW", "OIHW", "NCHW"), feature_group_count=Cout)
    return z + b_dw.reshape(1, Cout, 1, 1)


if __name__ == "__main__":
    key = jax.random.PRNGKey(0)
    k_x, k_pw, k_dw, k_b = jax.random.split(key, 4)

    N, Cin, H, W = 2, 4, 16, 16
    Cout, K, pad = 8, 3, 1

    x = jax.random.normal(k_x, (N, Cin, H, W), dtype=jnp.float32)
    # deterministic synthetic parameters (shapes match the torch module's __init__)
    w_pw = jax.random.normal(k_pw, (Cout, Cin, 1, 1), dtype=jnp.float32) * 0.1
    w_dw = jax.random.normal(k_dw, (Cout, 1, K, K), dtype=jnp.float32) * 0.1
    b_dw = jax.random.normal(k_b, (Cout,), dtype=jnp.float32) * 0.1

    out = jax.block_until_ready(bsconv_u_forward(x, w_pw, w_dw, b_dw, padding=pad))
    ref = jax.block_until_ready(bsconv_u_reference(x, w_pw, w_dw, b_dw, padding=pad))

    assert out.shape == (N, Cout, H, W), out.shape
    err = float(jnp.max(jnp.abs(out - ref)))
    assert jnp.allclose(out, ref, atol=1e-4, rtol=1e-4), err
    print("KERNEL_OK")
</pallas_src>

<mosaic_0001>
module attributes {stable_mosaic.version = 11 : i64} {
  func.func @_fused_bsconv_kernel(%arg0: i32, %arg1: i32, %arg2: memref<1x4x256xf32, #tpu.memory_space<vmem>>, %arg3: memref<1x1x4x32xf32, #tpu.memory_space<vmem>>, %arg4: memref<8x4xf32, #tpu.memory_space<vmem>>, %arg5: memref<8x9xf32, #tpu.memory_space<vmem>>, %arg6: memref<8x1xf32, #tpu.memory_space<vmem>>, %arg7: memref<1x8x256xf32, #tpu.memory_space<vmem>>, %arg8: memref<8x512xf32, #tpu.memory_space<vmem>>) attributes {dimension_semantics = [#tpu.dimension_semantics<parallel>, #tpu.dimension_semantics<parallel>], iteration_bounds = array<i64: 2, 1>, scalar_prefetch = 0 : i64, scratch_operands = 1 : i64, tpu.core_type = #tpu.core_type<tc>, window_params = [{transform_indices = @transform_0, window_bounds = array<i64: 1, 4, 256>}, {transform_indices = @transform_1, window_bounds = array<i64: 1, 1, 4, 32>}, {pipeline_mode = #tpu.pipeline_mode<synchronous>, transform_indices = @transform_2, window_bounds = array<i64: 8, 4>}, {pipeline_mode = #tpu.pipeline_mode<synchronous>, transform_indices = @transform_3, window_bounds = array<i64: 8, 9>}, {pipeline_mode = #tpu.pipeline_mode<synchronous>, transform_indices = @transform_4, window_bounds = array<i64: 8, 1>}, {transform_indices = @transform_5, window_bounds = array<i64: 1, 8, 256>}]} {
    %c0 = arith.constant 0 : index
    %c0_0 = arith.constant 0 : index
    %0 = vector.load %arg4[%c0, %c0_0] : memref<8x4xf32, #tpu.memory_space<vmem>>, vector<8x4xf32>
    %c0_1 = arith.constant 0 : index
    %c0_2 = arith.constant 0 : index
    %c0_3 = arith.constant 0 : index
    %1 = vector.load %arg2[%c0_1, %c0_2, %c0_3] : memref<1x4x256xf32, #tpu.memory_space<vmem>>, vector<1x4x256xf32>
    %2 = vector.shape_cast %1 : vector<1x4x256xf32> to vector<4x256xf32>
    %3 = vector.extract_strided_slice %0 {offsets = [0, 0], sizes = [8, 1], strides = [1, 1]} : vector<8x4xf32> to vector<8x1xf32>
    %4 = vector.extract_strided_slice %2 {offsets = [0, 0], sizes = [1, 256], strides = [1, 1]} : vector<4x256xf32> to vector<1x256xf32>
    %5 = vector.broadcast %3 : vector<8x1xf32> to vector<8x256xf32>
    %6 = vector.broadcast %4 : vector<1x256xf32> to vector<8x256xf32>
    %7 = arith.mulf %5, %6 : vector<8x256xf32>
    %8 = vector.extract_strided_slice %0 {offsets = [0, 1], sizes = [8, 1], strides = [1, 1]} : vector<8x4xf32> to vector<8x1xf32>
    %9 = vector.extract_strided_slice %2 {offsets = [1, 0], sizes = [1, 256], strides = [1, 1]} : vector<4x256xf32> to vector<1x256xf32>
    %10 = vector.broadcast %8 : vector<8x1xf32> to vector<8x256xf32>
    %11 = vector.broadcast %9 : vector<1x256xf32> to vector<8x256xf32>
    %12 = arith.mulf %10, %11 : vector<8x256xf32>
    %13 = arith.addf %7, %12 : vector<8x256xf32>
    %14 = vector.extract_strided_slice %0 {offsets = [0, 2], sizes = [8, 1], strides = [1, 1]} : vector<8x4xf32> to vector<8x1xf32>
    %15 = vector.extract_strided_slice %2 {offsets = [2, 0], sizes = [1, 256], strides = [1, 1]} : vector<4x256xf32> to vector<1x256xf32>
    %16 = vector.broadcast %14 : vector<8x1xf32> to vector<8x256xf32>
    %17 = vector.broadcast %15 : vector<1x256xf32> to vector<8x256xf32>
    %18 = arith.mulf %16, %17 : vector<8x256xf32>
    %19 = arith.addf %13, %18 : vector<8x256xf32>
    %20 = vector.extract_strided_slice %0 {offsets = [0, 3], sizes = [8, 1], strides = [1, 1]} : vector<8x4xf32> to vector<8x1xf32>
    %21 = vector.extract_strided_slice %2 {offsets = [3, 0], sizes = [1, 256], strides = [1, 1]} : vector<4x256xf32> to vector<1x256xf32>
    %22 = vector.broadcast %20 : vector<8x1xf32> to vector<8x256xf32>
    %23 = vector.broadcast %21 : vector<1x256xf32> to vector<8x256xf32>
    %24 = arith.mulf %22, %23 : vector<8x256xf32>
    %25 = arith.addf %19, %24 : vector<8x256xf32>
    %c0_4 = arith.constant 0 : index
    %c128 = arith.constant 128 : index
    %26 = vector.load %arg8[%c0_4, %c128] : memref<8x512xf32, #tpu.memory_space<vmem>>, vector<8x256xf32>
    tpu.vector_store %arg8[%c0_4, %c128], %25 {strides = array<i32>} : memref<8x512xf32, #tpu.memory_space<vmem>>, vector<8x256xf32>,
    %c0_5 = arith.constant 0 : index
    %c0_6 = arith.constant 0 : index
    %c0_7 = arith.constant 0 : index
    %c0_8 = arith.constant 0 : index
    %27 = vector.load %arg3[%c0_5, %c0_6, %c0_7, %c0_8] : memref<1x1x4x32xf32, #tpu.memory_space<vmem>>, vector<1x1x4x32xf32>
    %28 = vector.shape_cast %27 : vector<1x1x4x32xf32> to vector<4x32xf32>
    %29 = vector.extract_strided_slice %0 {offsets = [0, 0], sizes = [8, 1], strides = [1, 1]} : vector<8x4xf32> to vector<8x1xf32>
    %30 = vector.extract_strided_slice %28 {offsets = [0, 0], sizes = [1, 32], strides = [1, 1]} : vector<4x32xf32> to vector<1x32xf32>
    %31 = vector.broadcast %29 : vector<8x1xf32> to vector<8x32xf32>
    %32 = vector.broadcast %30 : vector<1x32xf32> to vector<8x32xf32>
    %33 = arith.mulf %31, %32 : vector<8x32xf32>
    %34 = vector.extract_strided_slice %0 {offsets = [0, 1], sizes = [8, 1], strides = [1, 1]} : vector<8x4xf32> to vector<8x1xf32>
    %35 = vector.extract_strided_slice %28 {offsets = [1, 0], sizes = [1, 32], strides = [1, 1]} : vector<4x32xf32> to vector<1x32xf32>
    %36 = vector.broadcast %34 : vector<8x1xf32> to vector<8x32xf32>
    %37 = vector.broadcast %35 : vector<1x32xf32> to vector<8x32xf32>
    %38 = arith.mulf %36, %37 : vector<8x32xf32>
    %39 = arith.addf %33, %38 : vector<8x32xf32>
    %40 = vector.extract_strided_slice %0 {offsets = [0, 2], sizes = [8, 1], strides = [1, 1]} : vector<8x4xf32> to vector<8x1xf32>
    %41 = vector.extract_strided_slice %28 {offsets = [2, 0], sizes = [1, 32], strides = [1, 1]} : vector<4x32xf32> to vector<1x32xf32>
    %42 = vector.broadcast %40 : vector<8x1xf32> to vector<8x32xf32>
    %43 = vector.broadcast %41 : vector<1x32xf32> to vector<8x32xf32>
    %44 = arith.mulf %42, %43 : vector<8x32xf32>
    %45 = arith.addf %39, %44 : vector<8x32xf32>
    %46 = vector.extract_strided_slice %0 {offsets = [0, 3], sizes = [8, 1], strides = [1, 1]} : vector<8x4xf32> to vector<8x1xf32>
    %47 = vector.extract_strided_slice %28 {offsets = [3, 0], sizes = [1, 32], strides = [1, 1]} : vector<4x32xf32> to vector<1x32xf32>
    %48 = vector.broadcast %46 : vector<8x1xf32> to vector<8x32xf32>
    %49 = vector.broadcast %47 : vector<1x32xf32> to vector<8x32xf32>
    %50 = arith.mulf %48, %49 : vector<8x32xf32>
    %51 = arith.addf %45, %50 : vector<8x32xf32>
    %52 = vector.extract_strided_slice %51 {offsets = [0, 0], sizes = [8, 16], strides = [1, 1]} : vector<8x32xf32> to vector<8x16xf32>
    %c0_9 = arith.constant 0 : index
    %c112 = arith.constant 112 : index
    %53 = vector.load %arg8[%c0_9, %c112] : memref<8x512xf32, #tpu.memory_space<vmem>>, vector<8x16xf32>
    tpu.vector_store %arg8[%c0_9, %c112], %52 {strides = array<i32>} : memref<8x512xf32, #tpu.memory_space<vmem>>, vector<8x16xf32>,
    %54 = vector.extract_strided_slice %51 {offsets = [0, 16], sizes = [8, 16], strides = [1, 1]} : vector<8x32xf32> to vector<8x16xf32>
    %c0_10 = arith.constant 0 : index
    %c384 = arith.constant 384 : index
    %55 = vector.load %arg8[%c0_10, %c384] : memref<8x512xf32, #tpu.memory_space<vmem>>, vector<8x16xf32>
    tpu.vector_store %arg8[%c0_10, %c384], %54 {strides = array<i32>} : memref<8x512xf32, #tpu.memory_space<vmem>>, vector<8x16xf32>,
    %56 = tpu.iota {dimensions = array<i32: 1>} : vector<1x256xi32>
    %c16_i32 = arith.constant 16 : i32
    %c0_i32 = arith.constant 0 : i32
    %57 = arith.cmpi eq, %c16_i32, %c0_i32 : i32
    %c1_i32 = arith.constant 1 : i32
    %58 = arith.select %57, %c1_i32, %c16_i32 : i32
    %59 = vector.broadcast %58 : i32 to vector<1x256xi32>
    %60 = arith.remsi %56, %59 : vector<1x256xi32>
    %c0_i32_11 = arith.constant 0 : i32
    %61 = vector.broadcast %c0_i32_11 : i32 to vector<1x256xi32>
    %62 = arith.cmpi ne, %60, %61 : vector<1x256xi32>
    %c0_i32_12 = arith.constant 0 : i32
    %63 = vector.broadcast %c0_i32_12 : i32 to vector<1x256xi32>
    %64 = arith.cmpi slt, %60, %63 : vector<1x256xi32>
    %c0_i32_13 = arith.constant 0 : i32
    %65 = arith.cmpi slt, %58, %c0_i32_13 : i32
    %66 = vector.broadcast %65 : i1 to vector<1x256xi1>
    %67 = vector.broadcast %66 : vector<1x256xi1> to vector<1x256xi1>
    %68 = arith.xori %64, %67 : vector<1x256xi1>
    %69 = arith.andi %68, %62 : vector<1x256xi1>
    %70 = vector.broadcast %58 : i32 to vector<1x256xi32>
    %71 = arith.addi %60, %70 : vector<1x256xi32>
    %72 = arith.select %69, %71, %60 : vector<1x256xi1>, vector<1x256xi32>
    %c0_14 = arith.constant 0 : index
    %c0_15 = arith.constant 0 : index
    %73 = vector.load %arg5[%c0_14, %c0_15] : memref<8x9xf32, #tpu.memory_space<vmem>>, vector<8x9xf32>
    %74 = vector.extract_strided_slice %73 {offsets = [0, 0], sizes = [8, 1], strides = [1, 1]} : vector<8x9xf32> to vector<8x1xf32>
    %75 = vector.extract_strided_slice %73 {offsets = [0, 1], sizes = [8, 1], strides = [1, 1]} : vector<8x9xf32> to vector<8x1xf32>
    %76 = vector.extract_strided_slice %73 {offsets = [0, 2], sizes = [8, 1], strides = [1, 1]} : vector<8x9xf32> to vector<8x1xf32>
    %77 = vector.extract_strided_slice %73 {offsets = [0, 3], sizes = [8, 1], strides = [1, 1]} : vector<8x9xf32> to vector<8x1xf32>
    %78 = vector.extract_strided_slice %73 {offsets = [0, 4], sizes = [8, 1], strides = [1, 1]} : vector<8x9xf32> to vector<8x1xf32>
    %79 = vector.extract_strided_slice %73 {offsets = [0, 5], sizes = [8, 1], strides = [1, 1]} : vector<8x9xf32> to vector<8x1xf32>
    %80 = vector.extract_strided_slice %73 {offsets = [0, 6], sizes = [8, 1], strides = [1, 1]} : vector<8x9xf32> to vector<8x1xf32>
    %81 = vector.extract_strided_slice %73 {offsets = [0, 7], sizes = [8, 1], strides = [1, 1]} : vector<8x9xf32> to vector<8x1xf32>
    %82 = vector.extract_strided_slice %73 {offsets = [0, 8], sizes = [8, 1], strides = [1, 1]} : vector<8x9xf32> to vector<8x1xf32>
    %c0_16 = arith.constant 0 : index
    %c0_17 = arith.constant 0 : index
    %83 = vector.load %arg6[%c0_16, %c0_17] : memref<8x1xf32, #tpu.memory_space<vmem>>, vector<8x1xf32>
    %c0_18 = arith.constant 0 : index
    %c111 = arith.constant 111 : index
    %84 = vector.load %arg8[%c0_18, %c111] : memref<8x512xf32, #tpu.memory_space<vmem>>, vector<8x256xf32>
    %85 = vector.broadcast %74 : vector<8x1xf32> to vector<8x256xf32>
    %86 = arith.mulf %84, %85 : vector<8x256xf32>
    %c0_19 = arith.constant 0 : index
    %c127 = arith.constant 127 : index
    %87 = vector.load %arg8[%c0_19, %c127] : memref<8x512xf32, #tpu.memory_space<vmem>>, vector<8x256xf32>
    %88 = vector.broadcast %77 : vector<8x1xf32> to vector<8x256xf32>
    %89 = arith.mulf %87, %88 : vector<8x256xf32>
    %90 = arith.addf %86, %89 : vector<8x256xf32>
    %c0_20 = arith.constant 0 : index
    %c143 = arith.constant 143 : index
    %91 = vector.load %arg8[%c0_20, %c143] : memref<8x512xf32, #tpu.memory_space<vmem>>, vector<8x256xf32>
    %92 = vector.broadcast %80 : vector<8x1xf32> to vector<8x256xf32>
    %93 = arith.mulf %91, %92 : vector<8x256xf32>
    %94 = arith.addf %90, %93 : vector<8x256xf32>
    %c1_i32_21 = arith.constant 1 : i32
    %95 = vector.broadcast %c1_i32_21 : i32 to vector<1x256xi32>
    %96 = arith.cmpi sge, %72, %95 : vector<1x256xi32>
    %cst = arith.constant 0.000000e+00 : f32
    %97 = vector.shape_cast %96 : vector<1x256xi1> to vector<1x256xi1>
    %98 = vector.broadcast %97 : vector<1x256xi1> to vector<8x256xi1>
    %99 = vector.broadcast %cst : f32 to vector<8x256xf32>
    %100 = arith.select %98, %94, %99 : vector<8x256xi1>, vector<8x256xf32>
    %101 = vector.broadcast %83 : vector<8x1xf32> to vector<8x256xf32>
    %102 = arith.addf %101, %100 : vector<8x256xf32>
    %c0_22 = arith.constant 0 : index
    %c112_23 = arith.constant 112 : index
    %103 = vector.load %arg8[%c0_22, %c112_23] : memref<8x512xf32, #tpu.memory_space<vmem>>, vector<8x256xf32>
    %104 = vector.broadcast %75 : vector<8x1xf32> to vector<8x256xf32>
    %105 = arith.mulf %103, %104 : vector<8x256xf32>
    %c0_24 = arith.constant 0 : index
    %c128_25 = arith.constant 128 : index
    %106 = vector.load %arg8[%c0_24, %c128_25] : memref<8x512xf32, #tpu.memory_space<vmem>>, vector<8x256xf32>
    %107 = vector.broadcast %78 : vector<8x1xf32> to vector<8x256xf32>
    %108 = arith.mulf %106, %107 : vector<8x256xf32>
    %109 = arith.addf %105, %108 : vector<8x256xf32>
    %c0_26 = arith.constant 0 : index
    %c144 = arith.constant 144 : index
    %110 = vector.load %arg8[%c0_26, %c144] : memref<8x512xf32, #tpu.memory_space<vmem>>, vector<8x256xf32>
    %111 = vector.broadcast %81 : vector<8x1xf32> to vector<8x256xf32>
    %112 = arith.mulf %110, %111 : vector<8x256xf32>
    %113 = arith.addf %109, %112 : vector<8x256xf32>
    %114 = arith.addf %102, %113 : vector<8x256xf32>
    %c0_27 = arith.constant 0 : index
    %c113 = arith.constant 113 : index
    %115 = vector.load %arg8[%c0_27, %c113] : memref<8x512xf32, #tpu.memory_space<vmem>>, vector<8x256xf32>
    %116 = vector.broadcast %76 : vector<8x1xf32> to vector<8x256xf32>
    %117 = arith.mulf %115, %116 : vector<8x256xf32>
    %c0_28 = arith.constant 0 : index
    %c129 = arith.constant 129 : index
    %118 = vector.load %arg8[%c0_28, %c129] : memref<8x512xf32, #tpu.memory_space<vmem>>, vector<8x256xf32>
    %119 = vector.broadcast %79 : vector<8x1xf32> to vector<8x256xf32>
    %120 = arith.mulf %118, %119 : vector<8x256xf32>
    %121 = arith.addf %117, %120 : vector<8x256xf32>
    %c0_29 = arith.constant 0 : index
    %c145 = arith.constant 145 : index
    %122 = vector.load %arg8[%c0_29, %c145] : memref<8x512xf32, #tpu.memory_space<vmem>>, vector<8x256xf32>
    %123 = vector.broadcast %82 : vector<8x1xf32> to vector<8x256xf32>
    %124 = arith.mulf %122, %123 : vector<8x256xf32>
    %125 = arith.addf %121, %124 : vector<8x256xf32>
    %c15_i32 = arith.constant 15 : i32
    %126 = vector.broadcast %c15_i32 : i32 to vector<1x256xi32>
    %127 = arith.cmpi slt, %72, %126 : vector<1x256xi32>
    %cst_30 = arith.constant 0.000000e+00 : f32
    %128 = vector.shape_cast %127 : vector<1x256xi1> to vector<1x256xi1>
    %129 = vector.broadcast %128 : vector<1x256xi1> to vector<8x256xi1>
    %130 = vector.broadcast %cst_30 : f32 to vector<8x256xf32>
    %131 = arith.select %129, %125, %130 : vector<8x256xi1>, vector<8x256xf32>
    %132 = arith.addf %114, %131 : vector<8x256xf32>
    %c0_31 = arith.constant 0 : index
    %c0_32 = arith.constant 0 : index
    %c0_33 = arith.constant 0 : index
    %133 = vector.load %arg7[%c0_31, %c0_32, %c0_33] : memref<1x8x256xf32, #tpu.memory_space<vmem>>, vector<1x8x256xf32>
    %134 = vector.shape_cast %133 : vector<1x8x256xf32> to vector<8x256xf32>
    %135 = vector.shape_cast %132 : vector<8x256xf32> to vector<1x8x256xf32>
    tpu.vector_store %arg7[%c0_31, %c0_32, %c0_33], %135 {strides = array<i32>} : memref<1x8x256xf32, #tpu.memory_space<vmem>>, vector<1x8x256xf32>,
    return
  }
  func.func @transform_0(%arg0: i32, %arg1: i32) -> (i32, i32, i32) {
    %c0_i32 = arith.constant 0 : i32
    %c0_i32_0 = arith.constant 0 : i32
    return %arg0, %c0_i32, %arg1 : i32, i32, i32
  }
  func.func @transform_1(%arg0: i32, %arg1: i32) -> (i32, i32, i32, i32) {
    %c0_i32 = arith.constant 0 : i32
    %c0_i32_0 = arith.constant 0 : i32
    %c0_i32_1 = arith.constant 0 : i32
    return %arg0, %arg1, %c0_i32, %c0_i32_0 : i32, i32, i32, i32
  }
  func.func @transform_2(%arg0: i32, %arg1: i32) -> (i32, i32) {
    %c0_i32 = arith.constant 0 : i32
    %c0_i32_0 = arith.constant 0 : i32
    %c0_i32_1 = arith.constant 0 : i32
    return %c0_i32, %c0_i32_0 : i32, i32
  }
  func.func @transform_3(%arg0: i32, %arg1: i32) -> (i32, i32) {
    %c0_i32 = arith.constant 0 : i32
    %c0_i32_0 = arith.constant 0 : i32
    %c0_i32_1 = arith.constant 0 : i32
    return %c0_i32, %c0_i32_0 : i32, i32
  }
  func.func @transform_4(%arg0: i32, %arg1: i32) -> (i32, i32) {
    %c0_i32 = arith.constant 0 : i32
    %c0_i32_0 = arith.constant 0 : i32
    %c0_i32_1 = arith.constant 0 : i32
    return %c0_i32, %c0_i32_0 : i32, i32
  }
  func.func @transform_5(%arg0: i32, %arg1: i32) -> (i32, i32, i32) {
    %c0_i32 = arith.constant 0 : i32
    %c0_i32_0 = arith.constant 0 : i32
    return %arg0, %c0_i32, %arg1 : i32, i32, i32
  }
}

</mosaic_0001>

<llo_original>
// kernel: bsconv_u_forward.1
$region0: #{bsconv_u_forward.1}
  #allocation0 [shape = 'u32[]', space=smem, size = 0x4, offset = 0x4, fixed_abs, tag = 'smem constant byte address 0x4 - core index']
  #allocation1 [shape = 'u32[144,128]{1,0:T(1,128)}', space=vmem, size = 0x12000, scoped, tag = 'internal scratch']
  #allocation2 [shape = 'f32[8,512]{1,0:T(8,128)}', space=vmem, size = 0x4000, scoped, tag = 'scratch operand']
  %s0 = inlined_call_operand.vmem [shape: f32[2,4,256], index: 0, kind: input, shape index: {}]
  %s1 = inlined_call_operand.vmem [shape: f32[2,1,4,32], index: 1, kind: input, shape index: {}]
  %s2 = inlined_call_operand.vmem [shape: f32[8,4], index: 2, kind: input, shape index: {}]
  %s3 = inlined_call_operand.vmem [shape: f32[8,9], index: 3, kind: input, shape index: {}]
  %s4 = inlined_call_operand.vmem [shape: f32[8,1], index: 4, kind: input, shape index: {}]
  %s5 = inlined_call_operand.vmem [shape: f32[2,8,256], index: 5, kind: output, shape index: {}]
  %s6 = sld [smem:[#allocation0]]
  $region53: #{bsconv_u_forward.1} parent=0
    _
  %s8 = ssub.s32 1, %s6
  %s9 = scalar_select 0, %s8, %s6
  loop: start=0, step=1, limit=4
  $region2: #{bsconv_u_forward.1} parent=0 // loop_pre_header
    _
  $region3: #{bsconv_u_forward.1} parent=0 // loop_header
    %s11 = sphi 0, %s15
    %p12 = scmp.ge.s32.totalorder %s11, 4
    %s18 = sphi 0, %s30
    %s19 = sphi 0, %s26
    %s20 = sphi 0, %s18
    %s21 = sphi 0, %s19
    %s22 = sphi 0, %s20
    %s23 = sphi 0, %s21
    %s35 = sphi 0, %s37
    %s38 = sphi 0, %s35
    %s39 = sphi 0, %s38
    %s55 = sphi 0, %s39
    %s63 = sphi 0, %s65
    %s66 = sphi 0, %s63
    %s67 = sphi 0, %s66
    %s83 = sphi 0, %s67
    %s87 = sphi 0, %s87
    %s89 = sphi 0, %s87
    %s90 = sphi 0, %s89
    %s104 = sphi 0, %s90
    %s108 = sphi 0, %s108
    %s110 = sphi 0, %s108
    %s111 = sphi 0, %s110
    %s125 = sphi 0, %s111
    %s129 = sphi 0, %s129
    %s131 = sphi 0, %s129
    %s132 = sphi 0, %s131
    %s146 = sphi 0, %s132
    %s154 = sphi 0, %s156
    %s157 = sphi 0, %s154
    %s158 = sphi 0, %s157
    %s174 = sphi 0, %s158
  $region4: #{bsconv_u_forward.1} parent=0 // loop_header_branch
    %14 = sbr.rel (%p12) target = $region8
  $region5: #{bsconv_u_forward.1} parent=0 // loop_body
    %s16 = ssub.s32 %s11, 1
    %s17 = ssub.s32 %s11, 2
    %s24 = sadd.s32 1, %s19
    %p25 = scmp.ge.s32.totalorder %s24, 1
    %s26 = scalar_select %p25, 0, %s24
    %s27 = sadd.s32 1, %s18
    %s28 = scalar_select %p25, %s27, %s18
    %p29 = scmp.ge.s32.totalorder %s28, 2
    %s30 = scalar_select %p29, 0, %s28
    %s31 = ssub.s32 %s18, %s30
    %s32 = ssub.s32 %s19, %s26
    %s33 = sor.u32 %s31, %s32
    %p34 = scmp.eq.s32.totalorder %s33, 0
    %s36 = sadd.s32 %s35, 1
    %s37 = scalar_select %p34, %s35, %s36
    %p40 = pneg %p34
    %p41 = scmp.eq.s32.totalorder %s11, 1
    %p42 = por %p40, %p41
    %p43 = scmp.ne.s32.totalorder %s35, %s38
    %p44 = scmp.eq.s32.totalorder %s11, 0
    %p45 = por %p43, %p44
    %p46 = scmp.ne.s32.totalorder %s35, %s38
    %p47 = scmp.eq.s32.totalorder %s16, 1
    %p48 = por %p46, %p47
    %p49 = scmp.ne.s32.totalorder %s38, %s39
    %p50 = scmp.eq.s32.totalorder %s16, 0
    %p51 = por %p49, %p50
    %p52 = scmp.ne.s32.totalorder %s38, %s39
    %p53 = scmp.eq.s32.totalorder %s17, 1
    %p54 = por %p52, %p53
    %p56 = scmp.ne.s32.totalorder %s39, %s55
    %p57 = scmp.eq.s32.totalorder %s17, 0
    %p58 = por %p56, %p57
    %s59 = ssub.s32 %s18, %s30
    %s60 = ssub.s32 %s19, %s26
    %s61 = sor.u32 %s59, %s60
    %p62 = scmp.eq.s32.totalorder %s61, 0
    %s64 = sadd.s32 %s63, 1
    %s65 = scalar_select %p62, %s63, %s64
    %p68 = pneg %p62
    %p69 = scmp.eq.s32.totalorder %s11, 1
    %p70 = por %p68, %p69
    %p71 = scmp.ne.s32.totalorder %s63, %s66
    %p72 = scmp.eq.s32.totalorder %s11, 0
    %p73 = por %p71, %p72
    %p74 = scmp.ne.s32.totalorder %s63, %s66
    %p75 = scmp.eq.s32.totalorder %s16, 1
    %p76 = por %p74, %p75
    %p77 = scmp.ne.s32.totalorder %s66, %s67
    %p78 = scmp.eq.s32.totalorder %s16, 0
    %p79 = por %p77, %p78
    %p80 = scmp.ne.s32.totalorder %s66, %s67
    %p81 = scmp.eq.s32.totalorder %s17, 1
    %p82 = por %p80, %p81
    %p84 = scmp.ne.s32.totalorder %s67, %s83
    %p85 = scmp.eq.s32.totalorder %s17, 0
    %p86 = por %p84, %p85
    %s88 = sadd.s32 %s87, 1
    %p91 = scmp.eq.s32.totalorder %s11, 1
    %p92 = scmp.ne.s32.totalorder %s87, %s89
    %p93 = scmp.eq.s32.totalorder %s11, 0
    %p94 = por %p92, %p93
    %p95 = scmp.ne.s32.totalorder %s87, %s89
    %p96 = scmp.eq.s32.totalorder %s16, 1
    %p97 = por %p95, %p96
    %p98 = scmp.ne.s32.totalorder %s89, %s90
    %p99 = scmp.eq.s32.totalorder %s16, 0
    %p100 = por %p98, %p99
    %p101 = scmp.ne.s32.totalorder %s89, %s90
    %p102 = scmp.eq.s32.totalorder %s17, 1
    %p103 = por %p101, %p102
    %p105 = scmp.ne.s32.totalorder %s90, %s104
    %p106 = scmp.eq.s32.totalorder %s17, 0
    %p107 = por %p105, %p106
    %s109 = sadd.s32 %s108, 1
    %p112 = scmp.eq.s32.totalorder %s11, 1
    %p113 = scmp.ne.s32.totalorder %s108, %s110
    %p114 = scmp.eq.s32.totalorder %s11, 0
    %p115 = por %p113, %p114
    %p116 = scmp.ne.s32.totalorder %s108, %s110
    %p117 = scmp.eq.s32.totalorder %s16, 1
    %p118 = por %p116, %p117
    %p119 = scmp.ne.s32.totalorder %s110, %s111
    %p120 = scmp.eq.s32.totalorder %s16, 0
    %p121 = por %p119, %p120
    %p122 = scmp.ne.s32.totalorder %s110, %s111
    %p123 = scmp.eq.s32.totalorder %s17, 1
    %p124 = por %p122, %p123
    %p126 = scmp.ne.s32.totalorder %s111, %s125
    %p127 = scmp.eq.s32.totalorder %s17, 0
    %p128 = por %p126, %p127
    %s130 = sadd.s32 %s129, 1
    %p133 = scmp.eq.s32.totalorder %s11, 1
    %p134 = scmp.ne.s32.totalorder %s129, %s131
    %p135 = scmp.eq.s32.totalorder %s11, 0
    %p136 = por %p134, %p135
    %p137 = scmp.ne.s32.totalorder %s129, %s131
    %p138 = scmp.eq.s32.totalorder %s16, 1
    %p139 = por %p137, %p138
    %p140 = scmp.ne.s32.totalorder %s131, %s132
    %p141 = scmp.eq.s32.totalorder %s16, 0
    %p142 = por %p140, %p141
    %p143 = scmp.ne.s32.totalorder %s131, %s132
    %p144 = scmp.eq.s32.totalorder %s17, 1
    %p145 = por %p143, %p144
    %p147 = scmp.ne.s32.totalorder %s132, %s146
    %p148 = scmp.eq.s32.totalorder %s17, 0
    %p149 = por %p147, %p148
    %s150 = ssub.s32 %s18, %s30
    %s151 = ssub.s32 %s19, %s26
    %s152 = sor.u32 %s150, %s151
    %p153 = scmp.eq.s32.totalorder %s152, 0
    %s155 = sadd.s32 %s154, 1
    %s156 = scalar_select %p153, %s154, %s155
    %p159 = pneg %p153
    %p160 = scmp.eq.s32.totalorder %s11, 1
    %p161 = por %p159, %p160
    %p162 = scmp.ne.s32.totalorder %s154, %s157
    %p163 = scmp.eq.s32.totalorder %s11, 0
    %p164 = por %p162, %p163
    %p165 = scmp.ne.s32.totalorder %s154, %s157
    %p166 = scmp.eq.s32.totalorder %s16, 1
    %p167 = por %p165, %p166
    %p168 = scmp.ne.s32.totalorder %s157, %s158
    %p169 = scmp.eq.s32.totalorder %s16, 0
    %p170 = por %p168, %p169
    %p171 = scmp.ne.s32.totalorder %s157, %s158
    %p172 = scmp.eq.s32.totalorder %s17, 1
    %p173 = por %p171, %p172
    %p175 = scmp.ne.s32.totalorder %s158, %s174
    %p176 = scmp.eq.s32.totalorder %s17, 0
    %p177 = por %p175, %p176
    %p178 = scmp.le.s32.totalorder 1, %s11
    %p179 = scmp.lt.s32.totalorder %s11, 3
    %p180 = pnand %p178, %p179
    %p181 = pneg %p180
    // Predicated region
    $region9: #{bsconv_u_forward.1} parent=5 // pred_check
      _
    $region10: #{bsconv_u_forward.1} parent=5 // pred_check_branch
      %183 = sbr.rel (%p180) target = $region12
    $region11: #{bsconv_u_forward.1} parent=5 // pred_region
      %s184 = ssub.s32 %s11, 1
      // Predicated region
      $region13: #{bsconv_u_forward.1} parent=11 // pred_check
        %p185 = pneg %p100
      $region14: #{bsconv_u_forward.1} parent=11 // pred_check_branch
        %187 = sbr.rel (%p185) target = $region16
      $region15: #{bsconv_u_forward.1} parent=11 // pred_region
        _
      $region16: #{bsconv_u_forward.1} parent=11 // pred_fallthru
        _
      // Predicated region
      $region17: #{bsconv_u_forward.1} parent=11 // pred_check
        %p188 = pneg %p121
      $region18: #{bsconv_u_forward.1} parent=11 // pred_check_branch
        %190 = sbr.rel (%p188) target = $region20
      $region19: #{bsconv_u_forward.1} parent=11 // pred_region
        _
      $region20: #{bsconv_u_forward.1} parent=11 // pred_fallthru
        _
      // Predicated region
      $region21: #{bsconv_u_forward.1} parent=11 // pred_check
        %p191 = pneg %p142
      $region22: #{bsconv_u_forward.1} parent=11 // pred_check_branch
        %193 = sbr.rel (%p191) target = $region24
      $region23: #{bsconv_u_forward.1} parent=11 // pred_region
        _
      $region24: #{bsconv_u_forward.1} parent=11 // pred_fallthru
        _
    $region12: #{bsconv_u_forward.1} parent=5 // pred_fallthru
      _
    %p194 = scmp.lt.s32.totalorder %s11, 2
    // Predicated region
    $region25: #{bsconv_u_forward.1} parent=5 // pred_check
      %p195 = pneg %p194
    $region26: #{bsconv_u_forward.1} parent=5 // pred_check_branch
      %197 = sbr.rel (%p195) target = $region28
    $region27: #{bsconv_u_forward.1} parent=5 // pred_region
      // Predicated region
      $region29: #{bsconv_u_forward.1} parent=27 // pred_check
        %p198 = pneg %p45
      $region30: #{bsconv_u_forward.1} parent=27 // pred_check_branch
        %200 = sbr.rel (%p198) target = $region32
      $region31: #{bsconv_u_forward.1} parent=27 // pred_region
        %s201 = smul.u32 2, %s19
        %p202 = scmp.lt.s32.totalorder %s18, 1
        %s203 = scalar_select %p202, %s18, 1
        %p204 = scmp.lt.s32.totalorder %s201, 1
        %s205 = scalar_select %p204, %s201, 1
        %s206 = smul.addr %s203, 2
        %s207 = sadd.s32 %s205, %s206
        %s208 = smul.addr %s207, 4
        %s209 = scalar_lea.vmem %s0, %s208
        %s210 = smul.u32 2, %s19
      $region32: #{bsconv_u_forward.1} parent=27 // pred_fallthru
        _
      // Predicated region
      $region33: #{bsconv_u_forward.1} parent=27 // pred_check
        %p211 = pneg %p73
      $region34: #{bsconv_u_forward.1} parent=27 // pred_check_branch
        %213 = sbr.rel (%p211) target = $region36
      $region35: #{bsconv_u_forward.1} parent=27 // pred_region
        %p214 = scmp.lt.s32.totalorder %s18, 1
        %s215 = scalar_select %p214, %s18, 1
        %p216 = scmp.lt.s32.totalorder %s19, 0
        %s217 = scalar_select %p216, %s19, 0
        %s218 = sadd.s32 %s217, %s215
        %s219 = smul.addr %s218, 4
        %s220 = scalar_lea.vmem %s1, %s219
      $region36: #{bsconv_u_forward.1} parent=27 // pred_fallthru
        _
    $region28: #{bsconv_u_forward.1} parent=5 // pred_fallthru
      _
    %p221 = scmp.le.s32.totalorder 1, %s11
    %p222 = scmp.lt.s32.totalorder %s11, 3
    %p223 = pnand %p221, %p222
    %p224 = pneg %p223
    // Predicated region
    $region37: #{bsconv_u_forward.1} parent=5 // pred_check
      _
    $region38: #{bsconv_u_forward.1} parent=5 // pred_check_branch
      %226 = sbr.rel (%p223) target = $region40
    $region39: #{bsconv_u_forward.1} parent=5 // pred_region
      %s227 = ssub.s32 %s11, 1
      %s228 = smul.u32 2, %s21
      %p229 = scmp.lt.s32.totalorder %s20, 1
      %s230 = scalar_select %p229, %s20, 1
      %p231 = scmp.lt.s32.totalorder %s228, 1
      %s232 = scalar_select %p231, %s228, 1
      %s233 = smul.addr %s230, 2
      %s234 = sadd.s32 %s232, %s233
      %s235 = smul.addr %s234, 4
      %s236 = scalar_lea.vmem %s0, %s235
      %p237 = pneg %p51
      %p238 = pneg %p48
      %p239 = scmp.lt.s32.totalorder %s20, 1
      %s240 = scalar_select %p239, %s20, 1
      %p241 = scmp.lt.s32.totalorder %s21, 0
      %s242 = scalar_select %p241, %s21, 0
      %s243 = sadd.s32 %s242, %s240
      %s244 = smul.addr %s243, 4
      %s245 = scalar_lea.vmem %s1, %s244
      %p246 = pneg %p79
      %p247 = pneg %p76
      %p248 = pneg %p100
      %p249 = pneg %p97
      %p250 = pneg %p121
      %p251 = pneg %p118
      %p252 = pneg %p142
      %p253 = pneg %p139
      %p254 = pneg %p170
      %p255 = pneg %p167
      %s256 = smul.u32 2, %s21
      %p257 = scmp.lt.s32.totalorder %s20, 1
      %s258 = scalar_select %p257, %s20, 1
      %p259 = scmp.lt.s32.totalorder %s256, 1
      %s260 = scalar_select %p259, %s256, 1
      %s261 = smul.addr %s258, 2
      %s262 = sadd.s32 %s260, %s261
      %s263 = smul.addr %s262, 8
      %s264 = scalar_lea.vmem %s5, %s263
      %s265 = smul.u32 2, %s21
      %p266 = scmp.lt.s32.totalorder %s20, 1
      %s267 = scalar_select %p266, %s20, 1
      %p268 = scmp.lt.s32.totalorder %s265, 1
      %s269 = scalar_select %p268, %s265, 1
      %s270 = smul.addr %s267, 2
      %s271 = sadd.s32 %s269, %s270
      %s272 = smul.addr %s271, 4
      %s273 = scalar_lea.vmem %s0, %s272
      %s274 = smul.u32 2, %s21
      %p275 = scmp.lt.s32.totalorder %s20, 1
      %s276 = scalar_select %p275, %s20, 1
      %p277 = scmp.lt.s32.totalorder %s21, 0
      %s278 = scalar_select %p277, %s21, 0
      %s279 = sadd.s32 %s278, %s276
      %s280 = smul.addr %s279, 4
      %s281 = scalar_lea.vmem %s1, %s280
      %s282 = smul.u32 2, %s21
      %p283 = scmp.lt.s32.totalorder %s20, 1
      %s284 = scalar_select %p283, %s20, 1
      %p285 = scmp.lt.s32.totalorder %s282, 1
      %s286 = scalar_select %p285, %s282, 1
      %s287 = smul.addr %s284, 2
      %s288 = sadd.s32 %s286, %s287
      %s289 = smul.addr %s288, 8
      %s290 = scalar_lea.vmem %s5, %s289
      %s291 = smul.u32 2, %s21
      %v292 = vld [vmem:[%s2] sm:$0xff]
      %v293 = vld [vmem:[%s273] sm:$0xff]
      %295 = vset.pattern.permute.xlu0 0
      %296 = vperm.xlu0 %295, %v292
      %v297 = vpop.permute.xlu0 %296
      %v300 = vlaneseq
      %v301 = vshrl.u32 %v300, 7
      %v302 = vsub.s32 0, %v301
      %v303 = vrot.slane %v293, %v302
      %v304 = vlaneseq
      %v305 = vshrl.u32 %v304, 7
      %v306 = vsub.s32 4, %v305
      %v307 = vrot.slane %v293, %v306
      %v310 = vlaneseq
      %v311 = vshrl.u32 %v310, 7
      %v312 = vsub.s32 0, %v311
      %v313 = vrot.slane %v303, %v312
      %v314 = vlaneseq
      %v315 = vshrl.u32 %v314, 7
      %v316 = vsub.s32 0, %v315
      %v317 = vrot.slane %v307, %v316
      %v318 = vmul.f32 %v297, %v313
      %v319 = vmul.f32 %v297, %v317
      %320 = vset.pattern.permute.xlu0 1
      %321 = vperm.xlu0 %320, %v292
      %v322 = vpop.permute.xlu0 %321
      %v324 = vlaneseq
      %v325 = vshrl.u32 %v324, 7
      %v326 = vsub.s32 1, %v325
      %v327 = vrot.slane %v293, %v326
      %v328 = vlaneseq
      %v329 = vshrl.u32 %v328, 7
      %v330 = vsub.s32 5, %v329
      %v331 = vrot.slane %v293, %v330
      %v334 = vlaneseq
      %v335 = vshrl.u32 %v334, 7
      %v336 = vsub.s32 1, %v335
      %v337 = vrot.slane %v327, %v336
      %v338 = vlaneseq
      %v339 = vshrl.u32 %v338, 7
      %v340 = vsub.s32 1, %v339
      %v341 = vrot.slane %v331, %v340
      %v342 = vmul.f32 %v322, %v337
      %v343 = vmul.f32 %v322, %v341
      %v344 = vadd.f32 %v318, %v342
      %v345 = vadd.f32 %v319, %v343
      %346 = vset.pattern.permute.xlu0 2
      %347 = vperm.xlu0 %346, %v292
      %v348 = vpop.permute.xlu0 %347
      %v350 = vlaneseq
      %v351 = vshrl.u32 %v350, 7
      %v352 = vsub.s32 2, %v351
      %v353 = vrot.slane %v293, %v352
      %v354 = vlaneseq
      %v355 = vshrl.u32 %v354, 7
      %v356 = vsub.s32 6, %v355
      %v357 = vrot.slane %v293, %v356
      %v360 = vlaneseq
      %v361 = vshrl.u32 %v360, 7
      %v362 = vsub.s32 2, %v361
      %v363 = vrot.slane %v353, %v362
      %v364 = vlaneseq
      %v365 = vshrl.u32 %v364, 7
      %v366 = vsub.s32 2, %v365
      %v367 = vrot.slane %v357, %v366
      %v368 = vmul.f32 %v348, %v363
      %v369 = vmul.f32 %v348, %v367
      %v370 = vadd.f32 %v344, %v368
      %v371 = vadd.f32 %v345, %v369
      %372 = vset.pattern.permute.xlu0 3
      %373 = vperm.xlu0 %372, %v292
      %v374 = vpop.permute.xlu0 %373
      %v376 = vlaneseq
      %v377 = vshrl.u32 %v376, 7
      %v378 = vsub.s32 3, %v377
      %v379 = vrot.slane %v293, %v378
      %v380 = vlaneseq
      %v381 = vshrl.u32 %v380, 7
      %v382 = vsub.s32 7, %v381
      %v383 = vrot.slane %v293, %v382
      %v386 = vlaneseq
      %v387 = vshrl.u32 %v386, 7
      %v388 = vsub.s32 3, %v387
      %v389 = vrot.slane %v379, %v388
      %v390 = vlaneseq
      %v391 = vshrl.u32 %v390, 7
      %v392 = vsub.s32 3, %v391
      %v393 = vrot.slane %v383, %v392
      %v394 = vmul.f32 %v374, %v389
      %v395 = vmul.f32 %v374, %v393
      %v396 = vadd.f32 %v370, %v394
      %v397 = vadd.f32 %v371, %v395
      %398 = vst [vmem:[#allocation2 + $0x8] sm:$0xff] %v396
      %399 = vst [vmem:[#allocation2 + $0x10] sm:$0xff] %v397
      %v400 = vld [vmem:[%s281] sm:$0xf]
      %v401 = vlaneseq
      %v402 = vshrl.u32 %v401, 7
      %v403 = vsub.s32 0, %v402
      %v404 = vrot.slane %v400, %v403
      %v405 = vmul.f32 %v297, %v404
      %v406 = vlaneseq
      %v407 = vshrl.u32 %v406, 7
      %v408 = vsub.s32 1, %v407
      %v409 = vrot.slane %v400, %v408
      %v410 = vmul.f32 %v322, %v409
      %v411 = vadd.f32 %v405, %v410
      %v412 = vlaneseq
      %v413 = vshrl.u32 %v412, 7
      %v414 = vsub.s32 2, %v413
      %v415 = vrot.slane %v400, %v414
      %v416 = vmul.f32 %v348, %v415
      %v417 = vadd.f32 %v411, %v416
      %v418 = vlaneseq
      %v419 = vshrl.u32 %v418, 7
      %v420 = vsub.s32 3, %v419
      %v421 = vrot.slane %v400, %v420
      %v422 = vmul.f32 %v374, %v421
      %v423 = vadd.f32 %v417, %v422
      %425 = vrot.lane.b32.xlu0 %v423, 112
      %v426 = vpop.permute.xlu0 %425
      %vm428 = vcmask 1048448
      %429 = vst.msk [vmem:[#allocation2] sm:$0xff] %vm428, %v426
      %vm430 = vcmask 130048
      %431 = vst.msk [vmem:[#allocation2 + $0x18] sm:$0xff] %vm430, %v426
      %v432 = vlaneseq
      %v433 = vand.u32 %v432, 127
      %v434 = vadd.s32 %v433, 128
      %vm435 = vcmp.lt.s32.totalorder %v433, 0
      %v436 = vsub.s32 0, %v433
      %v437 = vsel %vm435, %v436, %v433
      %v438 = vshrl.u32 %v437, 4
      %v439 = vand.u32 %v437, 15
      %v440 = vsub.s32 0, %v439
      %v441 = vsel %vm435, %v440, %v439
      %vm442 = vcmp.lt.s32.totalorder %v434, 0
      %v443 = vsub.s32 0, %v434
      %v444 = vsel %vm442, %v443, %v434
      %v445 = vshrl.u32 %v444, 4
      %v446 = vand.u32 %v444, 15
      %v447 = vsub.s32 0, %v446
      %v448 = vsel %vm442, %v447, %v446
      %vm449 = vcmp.ne.s32.totalorder %v441, 0
      %vm450 = vcmp.ne.s32.totalorder %v448, 0
      %vm451 = vcmp.lt.s32.totalorder %v441, 0
      %vm452 = vcmp.lt.s32.totalorder %v448, 0
      %vm453 = vmand %vm451, %vm449
      %vm454 = vmand %vm452, %vm450
      %v455 = vadd.s32 %v441, 16
      %v456 = vadd.s32 %v448, 16
      %v457 = vsel %vm453, %v455, %v441
      %v458 = vsel %vm454, %v456, %v448
      %v459 = vld [vmem:[%s3] sm:$0xff]
      %v460 = vld [vmem:[%s4] sm:$0xff]
      %v461 = vld [vmem:[#allocation2] sm:$0xff]
      %v462 = vld [vmem:[#allocation2 + $0x8] sm:$0xff]
      %v463 = vld [vmem:[#allocation2 + $0x10] sm:$0xff]
      %465 = vset.pattern.permute.xlu0 0
      %466 = vperm.xlu0 %465, %v459
      %v467 = vpop.permute.xlu0 %466
      %v469 = vmul.f32 %v461, %v467
      %v470 = vmul.f32 %v462, %v467
      %v471 = vmul.f32 %v463, %v467
      %472 = vset.pattern.permute.xlu0 3
      %473 = vperm.xlu0 %472, %v459
      %v474 = vpop.permute.xlu0 %473
      %v476 = vmul.f32 %v461, %v474
      %v477 = vmul.f32 %v462, %v474
      %v478 = vmul.f32 %v463, %v474
      %482 = vrot.lane.b32.xlu0 %v476, 112
      %v483 = vpop.permute.xlu0 %482
      %484 = vrot.lane.b32.xlu0 %v477, 112
      %v485 = vpop.permute.xlu0 %484
      %486 = vrot.lane.b32.xlu0 %v478, 112
      %v487 = vpop.permute.xlu0 %486
      %vm488 = vcmask 916480
      %v489 = vsel %vm488, %v483, %v485
      %v490 = vsel %vm488, %v485, %v487
      %v494 = vadd.f32 %v469, %v489
      %v495 = vadd.f32 %v470, %v490
      %v496 = vadd.f32 %v471, %v487
      %v497 = vld [vmem:[#allocation2 + $0x8] sm:$0xff]
      %v498 = vld [vmem:[#allocation2 + $0x10] sm:$0xff]
      %v499 = vld [vmem:[#allocation2 + $0x18] sm:$0xff]
      %500 = vset.pattern.permute.xlu0 6
      %501 = vperm.xlu0 %500, %v459
      %v502 = vpop.permute.xlu0 %501
      %v504 = vmul.f32 %v497, %v502
      %v505 = vmul.f32 %v498, %v502
      %v506 = vmul.f32 %v499, %v502
      %510 = vrot.lane.b32.xlu0 %v504, 96
      %v511 = vpop.permute.xlu0 %510
      %512 = vrot.lane.b32.xlu0 %v505, 96
      %v513 = vpop.permute.xlu0 %512
      %514 = vrot.lane.b32.xlu0 %v506, 96
      %v515 = vpop.permute.xlu0 %514
      %vm516 = vcmask 785408
      %v517 = vsel %vm516, %v511, %v513
      %v518 = vsel %vm516, %v513, %v515
      %v522 = vadd.f32 %v494, %v511
      %v523 = vadd.f32 %v495, %v517
      %v524 = vadd.f32 %v496, %v518
      %vm525 = vcmp.ge.s32.totalorder %v457, 1
      %vm526 = vcmp.ge.s32.totalorder %v458, 1
      %v527 = vsel %vm525, 1, 0
      %v528 = vsel %vm526, 1, 0
      %vm529 = vcmp.eq.s32.totalorder %v527, 1
      %vm530 = vcmp.eq.s32.totalorder %v528, 1
      %534 = vrot.lane.b32.xlu0 %v522, 17
      %v535 = vpop.permute.xlu0 %534
      %536 = vrot.lane.b32.xlu0 %v523, 17
      %v537 = vpop.permute.xlu0 %536
      %538 = vrot.lane.b32.xlu0 %v524, 17
      %v539 = vpop.permute.xlu0 %538
      %vm540 = vcmask 138240
      %v541 = vsel %vm540, %v535, %v537
      %v542 = vsel %vm540, %v537, %v539
      %v545 = vsel %vm529, %v541, 0.0
      %v546 = vsel %vm530, %v542, 0.0
      %548 = vset.pattern.permute.xlu0 0
      %549 = vperm.xlu0 %548, %v460
      %v550 = vpop.permute.xlu0 %549
      %v552 = vadd.f32 %v550, %v545
      %v553 = vadd.f32 %v550, %v546
      %554 = vset.pattern.permute.xlu0 1
      %555 = vperm.xlu0 %554, %v459
      %v556 = vpop.permute.xlu0 %555
      %v558 = vmul.f32 %v461, %v556
      %v559 = vmul.f32 %v462, %v556
      %v560 = vmul.f32 %v463, %v556
      %561 = vset.pattern.permute.xlu0 4
      %562 = vperm.xlu0 %561, %v459
      %v563 = vpop.permute.xlu0 %562
      %v565 = vmul.f32 %v462, %v563
      %v566 = vmul.f32 %v463, %v563
      %569 = vrot.lane.b32.xlu0 %v565, 112
      %v570 = vpop.permute.xlu0 %569
      %571 = vrot.lane.b32.xlu0 %v566, 112
      %v572 = vpop.permute.xlu0 %571
      %v573 = vsel %vm488, %v570, %v572
      %v577 = vadd.f32 %v558, %v570
      %v578 = vadd.f32 %v559, %v573
      %v579 = vadd.f32 %v560, %v572
      %580 = vset.pattern.permute.xlu0 7
      %581 = vperm.xlu0 %580, %v459
      %v582 = vpop.permute.xlu0 %581
      %v584 = vmul.f32 %v497, %v582
      %v585 = vmul.f32 %v498, %v582
      %v586 = vmul.f32 %v499, %v582
      %590 = vrot.lane.b32.xlu0 %v584, 96
      %v591 = vpop.permute.xlu0 %590
      %592 = vrot.lane.b32.xlu0 %v585, 96
      %v593 = vpop.permute.xlu0 %592
      %594 = vrot.lane.b32.xlu0 %v586, 96
      %v595 = vpop.permute.xlu0 %594
      %v596 = vsel %vm516, %v591, %v593
      %v597 = vsel %vm516, %v593, %v595
      %v601 = vadd.f32 %v577, %v591
      %v602 = vadd.f32 %v578, %v596
      %v603 = vadd.f32 %v579, %v597
      %607 = vrot.lane.b32.xlu0 %v601, 16
      %v608 = vpop.permute.xlu0 %607
      %609 = vrot.lane.b32.xlu0 %v602, 16
      %v610 = vpop.permute.xlu0 %609
      %611 = vrot.lane.b32.xlu0 %v603, 16
      %v612 = vpop.permute.xlu0 %611
      %v613 = vsel %vm430, %v608, %v610
      %v614 = vsel %vm430, %v610, %v612
      %v617 = vadd.f32 %v552, %v613
      %v618 = vadd.f32 %v553, %v614
      %619 = vset.pattern.permute.xlu0 2
      %620 = vperm.xlu0 %619, %v459
      %v621 = vpop.permute.xlu0 %620
      %v623 = vmul.f32 %v461, %v621
      %v624 = vmul.f32 %v462, %v621
      %v625 = vmul.f32 %v463, %v621
      %626 = vset.pattern.permute.xlu0 5
      %627 = vperm.xlu0 %626, %v459
      %v628 = vpop.permute.xlu0 %627
      %v630 = vmul.f32 %v497, %v628
      %v631 = vmul.f32 %v498, %v628
      %v632 = vmul.f32 %v499, %v628
      %636 = vrot.lane.b32.xlu0 %v630, 112
      %v637 = vpop.permute.xlu0 %636
      %638 = vrot.lane.b32.xlu0 %v631, 112
      %v639 = vpop.permute.xlu0 %638
      %640 = vrot.lane.b32.xlu0 %v632, 112
      %v641 = vpop.permute.xlu0 %640
      %v642 = vsel %vm488, %v637, %v639
      %v643 = vsel %vm488, %v639, %v641
      %v647 = vadd.f32 %v623, %v637
      %v648 = vadd.f32 %v624, %v642
      %v649 = vadd.f32 %v625, %v643
      %650 = vset.pattern.permute.xlu0 8
      %651 = vperm.xlu0 %650, %v459
      %v652 = vpop.permute.xlu0 %651
      %v654 = vmul.f32 %v497, %v652
      %v655 = vmul.f32 %v498, %v652
      %v656 = vmul.f32 %v499, %v652
      %660 = vrot.lane.b32.xlu0 %v654, 96
      %v661 = vpop.permute.xlu0 %660
      %662 = vrot.lane.b32.xlu0 %v655, 96
      %v663 = vpop.permute.xlu0 %662
      %664 = vrot.lane.b32.xlu0 %v656, 96
      %v665 = vpop.permute.xlu0 %664
      %v666 = vsel %vm516, %v661, %v663
      %v667 = vsel %vm516, %v663, %v665
      %v671 = vadd.f32 %v647, %v661
      %v672 = vadd.f32 %v648, %v666
      %v673 = vadd.f32 %v649, %v667
      %vm674 = vcmp.lt.s32.totalorder %v457, 15
      %vm675 = vcmp.lt.s32.totalorder %v458, 15
      %v676 = vsel %vm674, 1, 0
      %v677 = vsel %vm675, 1, 0
      %vm678 = vcmp.eq.s32.totalorder %v676, 1
      %vm679 = vcmp.eq.s32.totalorder %v677, 1
      %683 = vrot.lane.b32.xlu0 %v671, 15
      %v684 = vpop.permute.xlu0 %683
      %685 = vrot.lane.b32.xlu0 %v672, 15
      %v686 = vpop.permute.xlu0 %685
      %687 = vrot.lane.b32.xlu0 %v673, 15
      %v688 = vpop.permute.xlu0 %687
      %vm689 = vcmask 121856
      %v690 = vsel %vm689, %v684, %v686
      %v691 = vsel %vm689, %v686, %v688
      %v694 = vsel %vm678, %v690, 0.0
      %v695 = vsel %vm679, %v691, 0.0
      %v696 = vadd.f32 %v617, %v694
      %v697 = vadd.f32 %v618, %v695
      %698 = vst [vmem:[%s290] sm:$0xff] %v696
      %699 = vst [vmem:[%s290 + $0x8] sm:$0xff] %v697
      %s700 = smul.u32 2, %s21
      %p701 = scmp.lt.s32.totalorder %s20, 1
      %s702 = scalar_select %p701, %s20, 1
      %p703 = scmp.lt.s32.totalorder %s700, 1
      %s704 = scalar_select %p703, %s700, 1
      %s705 = smul.addr %s702, 2
      %s706 = sadd.s32 %s704, %s705
      %s707 = smul.addr %s706, 8
      %s708 = scalar_lea.vmem %s5, %s707
      // Predicated region
      $region41: #{bsconv_u_forward.1} parent=39 // pred_check
        %p709 = pneg %p167
      $region42: #{bsconv_u_forward.1} parent=39 // pred_check_branch
        %711 = sbr.rel (%p709) target = $region44
      $region43: #{bsconv_u_forward.1} parent=39 // pred_region
        %s712 = smul.u32 2, %s21
      $region44: #{bsconv_u_forward.1} parent=39 // pred_fallthru
        _
    $region40: #{bsconv_u_forward.1} parent=5 // pred_fallthru
      _
    %p713 = scmp.le.s32.totalorder 2, %s11
    // Predicated region
    $region45: #{bsconv_u_forward.1} parent=5 // pred_check
      %p714 = pneg %p713
    $region46: #{bsconv_u_forward.1} parent=5 // pred_check_branch
      %716 = sbr.rel (%p714) target = $region48
    $region47: #{bsconv_u_forward.1} parent=5 // pred_region
      %s717 = ssub.s32 %s11, 2
      // Predicated region
      $region49: #{bsconv_u_forward.1} parent=47 // pred_check
        %p718 = pneg %p173
      $region50: #{bsconv_u_forward.1} parent=47 // pred_check_branch
        %720 = sbr.rel (%p718) target = $region52
      $region51: #{bsconv_u_forward.1} parent=47 // pred_region
        %s721 = smul.u32 2, %s23
        %p722 = scmp.lt.s32.totalorder %s22, 1
        %s723 = scalar_select %p722, %s22, 1
        %p724 = scmp.lt.s32.totalorder %s721, 1
        %s725 = scalar_select %p724, %s721, 1
        %s726 = smul.addr %s723, 2
        %s727 = sadd.s32 %s725, %s726
        %s728 = smul.addr %s727, 8
        %s729 = scalar_lea.vmem %s5, %s728
      $region52: #{bsconv_u_forward.1} parent=47 // pred_fallthru
        _
    $region48: #{bsconv_u_forward.1} parent=5 // pred_fallthru
      _
  $region6: #{bsconv_u_forward.1} parent=0 // loop_footer
    %s15 = sadd.s32 1, %s11
  $region7: #{bsconv_u_forward.1} parent=0 // loop_footer_branch
    %10 = sbr.rel target = $region3
  $region8: #{bsconv_u_forward.1} parent=0 // loop_exit
    _

</llo_original>
